<compile_context>
chip_gen: v5e
topology: v5e:2x2
jax: 0.10.0
libtpu: 0.0.40
codegen_flags: <defaults>
</compile_context>

<pallas_src>
import functools
import math

import jax
import jax.numpy as jnp
from jax import lax
from jax.experimental import pallas as pl
from jax.experimental.pallas import tpu as pltpu


# ----------------------------------------------------------------------------
# In-kernel math helpers (all f32 elementwise; VPU/EUP friendly on v5e too)
# ----------------------------------------------------------------------------
def _erf(x):
    # Abramowitz & Stegun 7.1.26 (max abs err ~1.5e-7); avoids relying on an erf
    # lowering in Mosaic.
    a1, a2, a3, a4, a5 = 0.254829592, -0.284496736, 1.421413741, -1.453152027, 1.061405429
    p = 0.3275911
    s = jnp.where(x >= 0, 1.0, -1.0)
    z = jnp.abs(x)
    t = 1.0 / (1.0 + p * z)
    poly = ((((a5 * t + a4) * t + a3) * t + a2) * t + a1) * t
    return s * (1.0 - poly * jnp.exp(-z * z))


def _gelu_exact(x):
    # Matches torch.nn.GELU() default (exact erf formulation).
    return 0.5 * x * (1.0 + _erf(x * (1.0 / math.sqrt(2.0))))


def _layernorm(x, g, b, eps):
    mu = jnp.mean(x, axis=-1, keepdims=True)
    xc = x - mu
    var = jnp.mean(xc * xc, axis=-1, keepdims=True)
    return xc * lax.rsqrt(var + eps) * g + b


# ----------------------------------------------------------------------------
# Row-tiled linear (used for decoder_embed)
# ----------------------------------------------------------------------------
def _linear_kernel(x_ref, w_ref, b_ref, o_ref, *, act):
    y = jnp.dot(x_ref[...], w_ref[...], preferred_element_type=jnp.float32) + b_ref[...]
    if act == "gelu":
        y = _gelu_exact(y)
    o_ref[...] = y.astype(o_ref.dtype)


def linear(x2d, w, b, act=None, tm=256):
    M, K = x2d.shape
    N = w.shape[1]
    tm = M if M <= tm else tm  # full slab when tiny; 256-row tiles otherwise
    grid = (pl.cdiv(M, tm),)
    flops = 2 * M * K * N
    transc = M * N if act == "gelu" else 0
    bytes_acc = 4 * (M * K + K * N + N + M * N)
    # TODO(synk): pad N up to a multiple of 128 for lane-dense stores when N < 128.
    return pl.pallas_call(
        functools.partial(_linear_kernel, act=act),
        out_shape=jax.ShapeDtypeStruct((M, N), jnp.float32),
        grid=grid,
        in_specs=[
            pl.BlockSpec((tm, K), lambda i: (i, 0)),
            pl.BlockSpec((K, N), lambda i: (0, 0)),
            pl.BlockSpec((1, N), lambda i: (0, 0)),
        ],
        out_specs=pl.BlockSpec((tm, N), lambda i: (i, 0)),
        compiler_params=pltpu.CompilerParams(dimension_semantics=("parallel",)),
        cost_estimate=pl.CostEstimate(
            flops=flops, transcendentals=transc, bytes_accessed=bytes_acc),
    )(x2d, w, b)


# ----------------------------------------------------------------------------
# Fused final LayerNorm + decoder_pred linear (row-tiled)
# ----------------------------------------------------------------------------
def _ln_linear_kernel(x_ref, g_ref, bln_ref, w_ref, b_ref, o_ref, *, eps):
    h = _layernorm(x_ref[...], g_ref[...], bln_ref[...], eps)
    y = jnp.dot(h, w_ref[...], preferred_element_type=jnp.float32) + b_ref[...]
    o_ref[...] = y.astype(o_ref.dtype)


def ln_linear(x2d, g, bln, w, b, eps=1e-5, tm=256):
    M, K = x2d.shape
    N = w.shape[1]
    tm = M if M <= tm else tm
    grid = (pl.cdiv(M, tm),)
    flops = 2 * M * K * N + 10 * M * K
    bytes_acc = 4 * (M * K + 2 * K + K * N + N + M * N)
    return pl.pallas_call(
        functools.partial(_ln_linear_kernel, eps=eps),
        out_shape=jax.ShapeDtypeStruct((M, N), jnp.float32),
        grid=grid,
        in_specs=[
            pl.BlockSpec((tm, K), lambda i: (i, 0)),
            pl.BlockSpec((1, K), lambda i: (0, 0)),
            pl.BlockSpec((1, K), lambda i: (0, 0)),
            pl.BlockSpec((K, N), lambda i: (0, 0)),
            pl.BlockSpec((1, N), lambda i: (0, 0)),
        ],
        out_specs=pl.BlockSpec((tm, N), lambda i: (i, 0)),
        compiler_params=pltpu.CompilerParams(dimension_semantics=("parallel",)),
        cost_estimate=pl.CostEstimate(
            flops=flops, transcendentals=M, bytes_accessed=bytes_acc),
    )(x2d, g, bln, w, b)


# ----------------------------------------------------------------------------
# Fused transformer block kernel: one pallas_call per block, grid over batch
# ----------------------------------------------------------------------------
def _block_kernel(x_ref, ln1_g_ref, ln1_b_ref, wqkv_ref, bqkv_ref, wo_ref, bo_ref,
                  ln2_g_ref, ln2_b_ref, w1_ref, b1_ref, w2_ref, b2_ref, o_ref,
                  *, num_heads, scale, eps):
    D = x_ref.shape[-1]
    hd = D // num_heads
    x = x_ref[0]                                                    # (T, D)

    # --- attention branch -----------------------------------------------------
    h = _layernorm(x, ln1_g_ref[...], ln1_b_ref[...], eps)
    qkv = jnp.dot(h, wqkv_ref[...], preferred_element_type=jnp.float32) + bqkv_ref[...]
    q, k, v = qkv[:, :D], qkv[:, D:2 * D], qkv[:, 2 * D:]

    # Per-head attention; scores via dot_general contracting the last dims of
    # q/k (no k.T materialization).  All heads are accumulated into one (T, D)
    # value so the write-back below is a single lane-dense store.
    # TODO(synk): with hd = D/H = 8 the per-head contraction is only 8-deep; at
    # production sizes pad/regroup heads for better MXU occupancy.
    dn = (((1,), (1,)), ((), ()))
    heads = []
    for i in range(num_heads):
        sl = slice(i * hd, (i + 1) * hd)
        s = lax.dot_general(q[:, sl], k[:, sl], dn,
                            preferred_element_type=jnp.float32) * scale
        s = s - jnp.max(s, axis=-1, keepdims=True)
        p = jnp.exp(s)
        p = p * pl.reciprocal(jnp.sum(p, axis=-1, keepdims=True), approx=True)
        heads.append(jnp.dot(p, v[:, sl], preferred_element_type=jnp.float32))
    att = jnp.concatenate(heads, axis=-1)                           # (T, D)

    x = x + jnp.dot(att, wo_ref[...], preferred_element_type=jnp.float32) + bo_ref[...]

    # --- MLP branch -------------------------------------------------------------
    h2 = _layernorm(x, ln2_g_ref[...], ln2_b_ref[...], eps)
    m = _gelu_exact(jnp.dot(h2, w1_ref[...], preferred_element_type=jnp.float32) + b1_ref[...])
    x = x + jnp.dot(m, w2_ref[...], preferred_element_type=jnp.float32) + b2_ref[...]

    o_ref[0] = x.astype(o_ref.dtype)
    # TODO(synk): nn.Dropout layers are identity at inference; training-mode RNG dropout omitted.


def transformer_block(x, blk, num_heads, scale, eps=1e-5):
    B, T, D = x.shape
    F = blk["w1"].shape[1]
    flops = B * (2 * T * D * 3 * D + 4 * T * T * D + 2 * T * D * D + 4 * T * D * F)
    transc = B * (num_heads * T * T + T * F)
    bytes_acc = 4 * (2 * B * T * D + 4 * D * D + D * F + F * D + 8 * D + 3 * D + 2 * F)
    kernel = functools.partial(_block_kernel, num_heads=num_heads, scale=scale, eps=eps)
    return pl.pallas_call(
        kernel,
        out_shape=jax.ShapeDtypeStruct((B, T, D), jnp.float32),
        grid=(B,),
        in_specs=[
            pl.BlockSpec((1, T, D), lambda b: (b, 0, 0)),       # x
            pl.BlockSpec((1, D), lambda b: (0, 0)),             # ln1_g
            pl.BlockSpec((1, D), lambda b: (0, 0)),             # ln1_b
            pl.BlockSpec((D, 3 * D), lambda b: (0, 0)),         # wqkv (fused q|k|v)
            pl.BlockSpec((1, 3 * D), lambda b: (0, 0)),         # bqkv
            pl.BlockSpec((D, D), lambda b: (0, 0)),             # wo
            pl.BlockSpec((1, D), lambda b: (0, 0)),             # bo
            pl.BlockSpec((1, D), lambda b: (0, 0)),             # ln2_g
            pl.BlockSpec((1, D), lambda b: (0, 0)),             # ln2_b
            pl.BlockSpec((D, F), lambda b: (0, 0)),             # w1
            pl.BlockSpec((1, F), lambda b: (0, 0)),             # b1
            pl.BlockSpec((F, D), lambda b: (0, 0)),             # w2
            pl.BlockSpec((1, D), lambda b: (0, 0)),             # b2
        ],
        out_specs=pl.BlockSpec((1, T, D), lambda b: (b, 0, 0)),
        compiler_params=pltpu.CompilerParams(
            dimension_semantics=("parallel",),       # shards batch across TCs on v7x
            vmem_limit_bytes=32 * 1024 * 1024),      # well under v7x 64 MiB physical
        cost_estimate=pl.CostEstimate(
            flops=flops, transcendentals=transc, bytes_accessed=bytes_acc),
    )(x, blk["ln1_g"], blk["ln1_b"], blk["wqkv"], blk["bqkv"], blk["wo"], blk["bo"],
      blk["ln2_g"], blk["ln2_b"], blk["w1"], blk["b1"], blk["w2"], blk["b2"])


# ----------------------------------------------------------------------------
# Parameter init (deterministic, synthetic)
# ----------------------------------------------------------------------------
def init_params(key, cfg):
    E = cfg["embed_size"]
    D = cfg["decoder_embed_size"]
    F = cfg["forward_expansion"] * D
    P = cfg["num_patches"]
    out_dim = cfg["patch_size"] ** 2 * cfg["num_channels"]
    keys = iter(jax.random.split(key, 64))

    def w(shape, scale=0.02):
        return scale * jax.random.normal(next(keys), shape, jnp.float32)

    params = dict(
        dec_embed_w=w((E, D)), dec_embed_b=w((1, D)),
        # nn.Parameter(torch.zeros(...)) in __init__; random here so the gather path is exercised.
        mask_token=w((1, 1, D)),
        pos_embed=w((1, P + 1, D)),
        ln_g=jnp.ones((1, D), jnp.float32), ln_b=jnp.zeros((1, D), jnp.float32),
        pred_w=w((D, out_dim)), pred_b=w((1, out_dim)),
        blocks=[],
    )
    for _ in range(cfg["decod_hidden_layers"]):
        params["blocks"].append(dict(
            ln1_g=jnp.ones((1, D), jnp.float32), ln1_b=jnp.zeros((1, D), jnp.float32),
            # q|k|v weights fused along the output dim (mathematically identical
            # to per-head nn.Linear(embed, head) stacks in the PyTorch module).
            wqkv=w((D, 3 * D)), bqkv=w((1, 3 * D)),
            wo=w((D, D)), bo=w((1, D)),
            ln2_g=jnp.ones((1, D), jnp.float32), ln2_b=jnp.zeros((1, D), jnp.float32),
            w1=w((D, F)), b1=w((1, F)),
            w2=w((F, D)), b2=w((1, D)),
        ))
    return params


# ----------------------------------------------------------------------------
# Decoder forward
# ----------------------------------------------------------------------------
def decoder_forward(params, x, ids_restore, cfg):
    B, L, E = x.shape
    D = cfg["decoder_embed_size"]
    H = cfg["num_attention_heads"]

    # decoder_embed (row-tiled linear kernel)
    x = linear(x.reshape(B * L, E), params["dec_embed_w"], params["dec_embed_b"]).reshape(B, L, D)

    # mask-token insertion + un-shuffle (torch.gather equivalent) -- JAX glue
    n_mask = ids_restore.shape[1] + 1 - L
    mask_tokens = jnp.broadcast_to(params["mask_token"], (B, n_mask, D))
    x_ = jnp.concatenate([x[:, 1:, :], mask_tokens], axis=1)
    idx = jnp.broadcast_to(ids_restore[:, :, None], (B, ids_restore.shape[1], D))
    x_ = jnp.take_along_axis(x_, idx, axis=1)
    x = jnp.concatenate([x[:, :1, :], x_], axis=1)
    x = x + params["pos_embed"]

    B, T, _ = x.shape
    scale = 1.0 / math.sqrt(D)  # AttentionHead divides by sqrt(embed_size), not head size

    # One fused Pallas kernel per transformer block
    for blk in params["blocks"]:
        x = transformer_block(x, blk, H, scale)

    # Final LayerNorm fused with decoder_pred
    x = ln_linear(x.reshape(B * T, D), params["ln_g"], params["ln_b"],
                  params["pred_w"], params["pred_b"]).reshape(B, T, -1)
    return x[:, 1:, :]


# ----------------------------------------------------------------------------
# Pure-JAX reference (mirrors the PyTorch module semantics) for verification
# ----------------------------------------------------------------------------
def _ref_layernorm(x, g, b, eps=1e-5):
    mu = x.mean(-1, keepdims=True)
    var = ((x - mu) ** 2).mean(-1, keepdims=True)
    return (x - mu) / jnp.sqrt(var + eps) * g + b


def ref_decoder(params, x, ids_restore, cfg):
    D = cfg["decoder_embed_size"]
    H = cfg["num_attention_heads"]
    B, L, _ = x.shape
    x = x @ params["dec_embed_w"] + params["dec_embed_b"]
    n_mask = ids_restore.shape[1] + 1 - L
    mask_tokens = jnp.broadcast_to(params["mask_token"], (B, n_mask, D))
    x_ = jnp.concatenate([x[:, 1:, :], mask_tokens], axis=1)
    idx = jnp.broadcast_to(ids_restore[:, :, None], (B, ids_restore.shape[1], D))
    x_ = jnp.take_along_axis(x_, idx, axis=1)
    x = jnp.concatenate([x[:, :1, :], x_], axis=1)
    x = x + params["pos_embed"]
    hd = D // H
    scale = 1.0 / math.sqrt(D)
    for blk in params["blocks"]:
        h = _ref_layernorm(x, blk["ln1_g"], blk["ln1_b"])
        qkv = h @ blk["wqkv"] + blk["bqkv"]
        q, k, v = qkv[..., :D], qkv[..., D:2 * D], qkv[..., 2 * D:]
        outs = []
        for i in range(H):
            qi, ki, vi = (t[..., i * hd:(i + 1) * hd] for t in (q, k, v))
            e = jnp.einsum("nqd,nkd->nqk", qi, ki) * scale
            a = jax.nn.softmax(e, axis=-1)
            outs.append(jnp.einsum("nql,nld->nqd", a, vi))
        a = jnp.concatenate(outs, axis=-1) @ blk["wo"] + blk["bo"]
        x = x + a
        h = _ref_layernorm(x, blk["ln2_g"], blk["ln2_b"])
        m = jax.nn.gelu(h @ blk["w1"] + blk["b1"], approximate=False)
        m = m @ blk["w2"] + blk["b2"]
        x = x + m
    x = _ref_layernorm(x, params["ln_g"], params["ln_b"])
    x = x @ params["pred_w"] + params["pred_b"]
    return x[:, 1:, :]


# ----------------------------------------------------------------------------
if __name__ == "__main__":
    cfg = dict(
        embed_size=32,
        decoder_embed_size=32,
        num_patches=16,
        patch_size=4,
        num_channels=3,
        forward_expansion=2,
        num_attention_heads=4,
        decod_hidden_layers=2,
    )
    key = jax.random.PRNGKey(0)
    k_par, k_x, k_ids = jax.random.split(key, 3)
    params = init_params(k_par, cfg)

    B = 2
    n_keep = 4  # visible patches kept by the encoder
    x = jax.random.normal(k_x, (B, n_keep + 1, cfg["embed_size"]), jnp.float32)  # +1 cls token
    ids_restore = jnp.stack(
        [jax.random.permutation(k, cfg["num_patches"]) for k in jax.random.split(k_ids, B)]
    ).astype(jnp.int32)

    out = decoder_forward(params, x, ids_restore, cfg)
    out = jax.block_until_ready(out)

    expected_shape = (B, cfg["num_patches"], cfg["patch_size"] ** 2 * cfg["num_channels"])
    assert out.shape == expected_shape, (out.shape, expected_shape)

    ref = ref_decoder(params, x, ids_restore, cfg)
    max_err = float(jnp.max(jnp.abs(out - ref)))
    assert jnp.allclose(out, ref, atol=1e-3, rtol=1e-3), f"max_err={max_err}"

    print("KERNEL_OK")
</pallas_src>

<mosaic_0001>
module attributes {stable_mosaic.version = 11 : i64} {
  func.func @_linear_kernel(%arg0: i32, %arg1: memref<10x32xf32, #tpu.memory_space<vmem>>, %arg2: memref<32x32xf32, #tpu.memory_space<vmem>>, %arg3: memref<1x32xf32, #tpu.memory_space<vmem>>, %arg4: memref<10x32xf32, #tpu.memory_space<vmem>>) attributes {dimension_semantics = [#tpu.dimension_semantics<parallel>], iteration_bounds = array<i64: 1>, scalar_prefetch = 0 : i64, scratch_operands = 0 : i64, tpu.core_type = #tpu.core_type<tc>, window_params = [{transform_indices = @transform_0, window_bounds = array<i64: 10, 32>}, {pipeline_mode = #tpu.pipeline_mode<synchronous>, transform_indices = @transform_1, window_bounds = array<i64: 32, 32>}, {pipeline_mode = #tpu.pipeline_mode<synchronous>, transform_indices = @transform_2, window_bounds = array<i64: 1, 32>}, {transform_indices = @transform_3, window_bounds = array<i64: 10, 32>}]} {
    %c0 = arith.constant 0 : index
    %c0_0 = arith.constant 0 : index
    %0 = vector.load %arg1[%c0, %c0_0] : memref<10x32xf32, #tpu.memory_space<vmem>>, vector<10x32xf32>
    %c0_1 = arith.constant 0 : index
    %c0_2 = arith.constant 0 : index
    %1 = vector.load %arg2[%c0_1, %c0_2] : memref<32x32xf32, #tpu.memory_space<vmem>>, vector<32x32xf32>
    %cst = arith.constant dense<0.000000e+00> : vector<10x32xf32>
    %2 = tpu.matmul %0, %1, %cst {dimension_numbers = #tpu.dot_dimension_numbers<[1], [0], [0], [1], [0, 0, 1, 1], [], []>} : vector<10x32xf32>, vector<32x32xf32>, vector<10x32xf32> -> vector<10x32xf32>
    %c0_3 = arith.constant 0 : index
    %c0_4 = arith.constant 0 : index
    %3 = vector.load %arg3[%c0_3, %c0_4] : memref<1x32xf32, #tpu.memory_space<vmem>>, vector<1x32xf32>
    %4 = vector.broadcast %3 : vector<1x32xf32> to vector<10x32xf32>
    %5 = arith.addf %2, %4 : vector<10x32xf32>
    %c0_5 = arith.constant 0 : index
    %c0_6 = arith.constant 0 : index
    %6 = vector.load %arg4[%c0_5, %c0_6] : memref<10x32xf32, #tpu.memory_space<vmem>>, vector<10x32xf32>
    tpu.vector_store %arg4[%c0_5, %c0_6], %5 {strides = array<i32>} : memref<10x32xf32, #tpu.memory_space<vmem>>, vector<10x32xf32>,
    return
  }
  func.func @transform_0(%arg0: i32) -> (i32, i32) {
    %c0_i32 = arith.constant 0 : i32
    %c0_i32_0 = arith.constant 0 : i32
    return %arg0, %c0_i32 : i32, i32
  }
  func.func @transform_1(%arg0: i32) -> (i32, i32) {
    %c0_i32 = arith.constant 0 : i32
    %c0_i32_0 = arith.constant 0 : i32
    %c0_i32_1 = arith.constant 0 : i32
    return %c0_i32, %c0_i32_0 : i32, i32
  }
  func.func @transform_2(%arg0: i32) -> (i32, i32) {
    %c0_i32 = arith.constant 0 : i32
    %c0_i32_0 = arith.constant 0 : i32
    %c0_i32_1 = arith.constant 0 : i32
    return %c0_i32, %c0_i32_0 : i32, i32
  }
  func.func @transform_3(%arg0: i32) -> (i32, i32) {
    %c0_i32 = arith.constant 0 : i32
    %c0_i32_0 = arith.constant 0 : i32
    return %arg0, %c0_i32 : i32, i32
  }
}

</mosaic_0001>

<llo_original>
// kernel: tpu_custom_call.1
$region0: #{tpu_custom_call.1}
  #allocation0 [shape = 'u32[]', space=smem, size = 0x4, offset = 0x4, fixed_abs, tag = 'smem constant byte address 0x4 - core index']
  #allocation1 [shape = 'u32[72,128]{1,0:T(1,128)}', space=vmem, size = 0x9000, scoped, tag = 'internal scratch']
  %s0 = inlined_call_operand.hbm [shape: f32[10,32], index: 0, kind: input, shape index: {}]
  %s1 = inlined_call_operand.hbm [shape: f32[32,32], index: 1, kind: input, shape index: {}]
  %s2 = inlined_call_operand.vmem [shape: f32[1,32], index: 2, kind: input, shape index: {}]
  %s3 = inlined_call_operand.hbm [shape: f32[10,32], index: 3, kind: output, shape index: {}]
  %s4 = sld [smem:[#allocation0]]
  $region30: #{tpu_custom_call.1} parent=0
    _
  %s6 = ssub.s32 1, %s4
  %s7 = scalar_select 0, %s6, %s4
  $region1: #{tpu_custom_call.1} parent=0
    #allocation2 [shape = 'u8[8192]{0}', space=vmem, size = 0x2000, scoped, tag = 'input window, operand 0, single buffered']
    #allocation3 [shape = 's32[1]{0}', space=sflag, size = 0x4, scoped, tag = 'scoped memory for tpu_custom_call.1']
    #allocation4 [shape = 's32[1]{0}', space=sflag, size = 0x4, scoped, tag = 'scoped memory for tpu_custom_call.1']
    #allocation5 [shape = 'u8[16384]{0}', space=vmem, size = 0x4000, scoped, tag = 'input window, operand 1, single buffered']
    #allocation6 [shape = 's32[1]{0}', space=sflag, size = 0x4, scoped, tag = 'scoped memory for tpu_custom_call.1']
    #allocation7 [shape = 'u8[8192]{0}', space=vmem, size = 0x2000, scoped, tag = 'output window, operand 0, single buffered']
    %8 = vsyncpa [#allocation3], 0
    %9 = vsyncpa [#allocation6], 0
    %10 = vsyncpa [#allocation4], 0
    // Predicated region
    $region2: #{tpu_custom_call.1} parent=1 // pred_check
      _
    $region3: #{tpu_custom_call.1} parent=1 // pred_check_branch
      %12 = sbr.rel (0) target = $region5
    $region4: #{tpu_custom_call.1} parent=1 // pred_region
      %14 = vsyncadd [#allocation3], 0
      %s15 = sshll.u32 %s0, 4
      %s16 = int_to_ptr.hbm [resolvable:$true] %s15
      %s17 = sshll.u32 [#allocation2], 4
      %s18 = int_to_ptr.vmem [resolvable:$true] %s17
      %23 = dma.hbm_to_vmem [thread:$0]  %s16, 256, %s18, [#allocation3], 128, 128, 8
    $region5: #{tpu_custom_call.1} parent=1 // pred_fallthru
      _
    // Predicated region
    $region6: #{tpu_custom_call.1} parent=1 // pred_check
      _
    $region7: #{tpu_custom_call.1} parent=1 // pred_check_branch
      %25 = sbr.rel (0) target = $region9
    $region8: #{tpu_custom_call.1} parent=1 // pred_region
      %27 = vsyncadd [#allocation6], 0
      %s28 = sshll.u32 %s1, 4
      %s29 = int_to_ptr.hbm [resolvable:$true] %s28
      %s30 = sshll.u32 [#allocation5], 4
      %s31 = int_to_ptr.vmem [resolvable:$true] %s30
      %36 = dma.hbm_to_vmem [thread:$0]  %s29, 512, %s31, [#allocation6], 128, 128, 8
    $region9: #{tpu_custom_call.1} parent=1 // pred_fallthru
      _
    // Predicated region
    $region10: #{tpu_custom_call.1} parent=1 // pred_check
      _
    $region11: #{tpu_custom_call.1} parent=1 // pred_check_branch
      %38 = sbr.rel (0) target = $region13
    $region12: #{tpu_custom_call.1} parent=1 // pred_region
      _
    $region13: #{tpu_custom_call.1} parent=1 // pred_fallthru
      _
    // Predicated region
    $region14: #{tpu_custom_call.1} parent=1 // pred_check
      _
    $region15: #{tpu_custom_call.1} parent=1 // pred_check_branch
      %40 = sbr.rel (0) target = $region17
    $region16: #{tpu_custom_call.1} parent=1 // pred_region
      %42 = dma.done [#allocation3], 256
    $region17: #{tpu_custom_call.1} parent=1 // pred_fallthru
      _
    // Predicated region
    $region18: #{tpu_custom_call.1} parent=1 // pred_check
      _
    $region19: #{tpu_custom_call.1} parent=1 // pred_check_branch
      %44 = sbr.rel (0) target = $region21
    $region20: #{tpu_custom_call.1} parent=1 // pred_region
      %46 = dma.done [#allocation6], 512
    $region21: #{tpu_custom_call.1} parent=1 // pred_fallthru
      _
    %v47 = vld [vmem:[#allocation2] sm:$0xff]
    %v48 = vld [vmem:[#allocation2 + $0x8] sm:$0x3]
    %v49 = vld [vmem:[#allocation5] sm:$0xff]
    %v50 = vld [vmem:[#allocation5 + $0x8] sm:$0xff]
    %v51 = vld [vmem:[#allocation5 + $0x10] sm:$0xff]
    %v52 = vld [vmem:[#allocation5 + $0x18] sm:$0xff]
    %v53 = vld [vmem:[%s2] sm:$0x1]
    %v55 = vperm.slane %v53, 0
    %vm57 = vcmask 261120
    %v59 = vsel %vm57, %v47, 0
    %v62 = vsel %vm57, %v48, 0
    %64 = vmatpush.msra.mxu0 0.0
    %65 = vmatpush.msra.mxu0 0.0
    %66 = vmatpush.msra.mxu0 0.0
    %67 = vmatpush.msra.mxu0 0.0
    %68 = vmatpush.msra.mxu0 0.0
    %69 = vmatpush.msra.mxu0 0.0
    %70 = vmatpush.msra.mxu0 0.0
    %71 = vmatpush.msra.mxu0 0.0
    %72 = vmatpush.msra.mxu0 0.0
    %73 = vmatpush.msra.mxu0 0.0
    %74 = vmatpush.msra.mxu0 0.0
    %75 = vmatpush.msra.mxu0 0.0
    %76 = vmatpush.msra.mxu0 %v52
    %77 = vmatpush.msra.mxu0 %v51
    %78 = vmatpush.msra.mxu0 %v50
    %79 = vmatpush.msra.mxu0 %v49
    %80 = vmatmul.f32.gmra.mxu0 %v59
    %v81 = vpop.f32.mrf.mxu0
    %v82 = vadd.f32 %v55, %v81
    %83 = vmatmul.f32.gmra.mxu0 %v62
    %v84 = vpop.f32.mrf.mxu0
    %v85 = vadd.f32 %v55, %v84
    %86 = vdwg.mxu0
    %87 = vst.msk [vmem:[#allocation7] sm:$0xff] %vm57, %v82
    %vm88 = vcmask 254976
    %89 = vst.msk [vmem:[#allocation7 + $0x8] sm:$0x3] %vm88, %v85
    // Predicated region
    $region22: #{tpu_custom_call.1} parent=1 // pred_check
      _
    $region23: #{tpu_custom_call.1} parent=1 // pred_check_branch
      %91 = sbr.rel (0) target = $region25
    $region24: #{tpu_custom_call.1} parent=1 // pred_region
      %93 = vsyncadd [#allocation4], 0
      %s94 = sshll.u32 [#allocation7], 4
      %s95 = int_to_ptr.vmem [resolvable:$true] %s94
      %s96 = sshll.u32 %s3, 4
      %s97 = int_to_ptr.hbm [resolvable:$true] %s96
      %102 = dma.vmem_to_hbm [thread:$0]  %s95, 256, %s97, [#allocation4], 128, 128, 8
    $region25: #{tpu_custom_call.1} parent=1 // pred_fallthru
      _
    // Predicated region
    $region26: #{tpu_custom_call.1} parent=1 // pred_check
      _
    $region27: #{tpu_custom_call.1} parent=1 // pred_check_branch
      %104 = sbr.rel (0) target = $region29
    $region28: #{tpu_custom_call.1} parent=1 // pred_region
      %106 = dma.done [#allocation4], 256
    $region29: #{tpu_custom_call.1} parent=1 // pred_fallthru
      _
    %107 = vsyncpa [#allocation3], 1
    %108 = vsyncpa [#allocation6], 1
    %109 = vsyncpa [#allocation4], 1

</llo_original>
